<compile_context>
chip_gen: v7x
topology: tpu7x:2x2x1
jax: 0.10.0
libtpu: 0.0.40
codegen_flags: <defaults>
</compile_context>

<pallas_src>
import jax
import jax.numpy as jnp
from jax.experimental import pallas as pl
from jax.experimental.pallas import tpu as pltpu

# Module hyper-parameters (the PyTorch file references module-level constants;
# small, shape-consistent values for this synthetic kernel).
INPUT_SIZE = 32
HIDDEN_SIZE_1 = 64
HIDDEN_SIZE_2 = 64
OUTPUT_SIZE = 4

BATCH = 16          # sublane-aligned (multiple of 8)
PAD = 128           # lane-dense uniform feature width for all layers


def snakenet_kernel(x_ref, w_ref, b_ref, o_ref):
    # x_ref: (B, PAD); w_ref: (3, PAD, PAD); b_ref: (3, 1, PAD); o_ref: (B, PAD)
    x = x_ref[...]

    # fc1 + ReLU (padded hidden lanes: weight 0, bias 0 -> stay exactly 0)
    h1 = jnp.dot(x, w_ref[0], preferred_element_type=jnp.float32) + b_ref[0]
    h1 = jnp.maximum(h1, 0.0)

    # fc2 + ReLU
    h2 = jnp.dot(h1, w_ref[1], preferred_element_type=jnp.float32) + b_ref[1]
    h2 = jnp.maximum(h2, 0.0)

    # fc3 (padded output lanes have bias -1e30 -> softmax prob exactly 0)
    logits = jnp.dot(h2, w_ref[2], preferred_element_type=jnp.float32) + b_ref[2]

    # Numerically-stable softmax over the feature axis (dim=1), exact divide.
    m = jnp.max(logits, axis=-1, keepdims=True)
    e = jnp.exp(logits - m)
    denom = jnp.sum(e, axis=-1, keepdims=True)
    o_ref[...] = (e / denom).astype(o_ref.dtype)   # full (B, PAD) unmasked vst


def snakenet_forward(x_pad, w_slab, b_slab):
    """x_pad: (B, PAD) f32 (zero-padded input). Returns padded (B, PAD) probs;
    columns [:OUTPUT_SIZE] are the softmax, the rest are exactly 0."""
    B = x_pad.shape[0]
    vmem = pl.BlockSpec(memory_space=pltpu.MemorySpace.VMEM)  # whole array in VMEM

    cost = pl.CostEstimate(
        flops=2 * B * PAD * PAD * 3,          # three (B,128)@(128,128) matmuls
        transcendentals=B * PAD,              # exp in the softmax
        bytes_accessed=(B * PAD + 3 * PAD * PAD + 3 * PAD + B * PAD) * 4,
    )

    return pl.pallas_call(
        snakenet_kernel,
        out_shape=jax.ShapeDtypeStruct((B, PAD), jnp.float32),
        in_specs=[vmem, vmem, vmem],
        out_specs=vmem,
        cost_estimate=cost,
    )(x_pad, w_slab, b_slab)


def init_params(key):
    """nn.Linear-style init; PyTorch weight (out, in) stored transposed as (in, out)."""
    ks = jax.random.split(key, 6)

    def lin(kw, kb, fan_in, fan_out):
        bound = 1.0 / jnp.sqrt(fan_in)
        w = jax.random.uniform(kw, (fan_in, fan_out), jnp.float32, -bound, bound)
        b = jax.random.uniform(kb, (1, fan_out), jnp.float32, -bound, bound)
        return w, b

    w1, b1 = lin(ks[0], ks[1], INPUT_SIZE, HIDDEN_SIZE_1)
    w2, b2 = lin(ks[2], ks[3], HIDDEN_SIZE_1, HIDDEN_SIZE_2)
    w3, b3 = lin(ks[4], ks[5], HIDDEN_SIZE_2, OUTPUT_SIZE)
    return {"w1": w1, "b1": b1, "w2": w2, "b2": b2, "w3": w3, "b3": b3}


def pack_params(p):
    """One-time prep: pack + pad all params into a (3,PAD,PAD) weight slab and a
    (3,1,PAD) bias slab. Hidden padding is 0 (ReLU keeps it 0); fc3 output
    padding gets bias -1e30 so its softmax probability is exactly 0."""
    w_slab = jnp.zeros((3, PAD, PAD), jnp.float32)
    w_slab = w_slab.at[0, :INPUT_SIZE, :HIDDEN_SIZE_1].set(p["w1"])
    w_slab = w_slab.at[1, :HIDDEN_SIZE_1, :HIDDEN_SIZE_2].set(p["w2"])
    w_slab = w_slab.at[2, :HIDDEN_SIZE_2, :OUTPUT_SIZE].set(p["w3"])

    b_slab = jnp.zeros((3, 1, PAD), jnp.float32)
    b_slab = b_slab.at[0, 0, :HIDDEN_SIZE_1].set(p["b1"][0])
    b_slab = b_slab.at[1, 0, :HIDDEN_SIZE_2].set(p["b2"][0])
    b_slab = b_slab.at[2, 0, :].set(-1e30)                      # f32-safe sentinel
    b_slab = b_slab.at[2, 0, :OUTPUT_SIZE].set(p["b3"][0])
    return w_slab, b_slab


def snakenet_reference(x, p):
    h1 = jnp.maximum(x @ p["w1"] + p["b1"], 0.0)
    h2 = jnp.maximum(h1 @ p["w2"] + p["b2"], 0.0)
    return jax.nn.softmax(h2 @ p["w3"] + p["b3"], axis=1)


if __name__ == "__main__":
    key = jax.random.PRNGKey(0)
    k_x, k_p = jax.random.split(key)

    x = jax.random.normal(k_x, (BATCH, INPUT_SIZE), dtype=jnp.float32)
    params = init_params(k_p)

    # One-time prep (hoisted out of the forward path).
    w_slab, b_slab = pack_params(params)
    x_pad = jnp.zeros((BATCH, PAD), jnp.float32).at[:, :INPUT_SIZE].set(x)

    out_padded = snakenet_forward(x_pad, w_slab, b_slab)
    out_padded = jax.block_until_ready(out_padded)

    ref = snakenet_reference(x, params)
    out = out_padded[:, :OUTPUT_SIZE]          # slice only for verification

    assert out_padded.shape == (BATCH, PAD)
    assert jnp.allclose(out, ref, atol=1e-5, rtol=1e-5)
    assert jnp.allclose(jnp.sum(out, axis=1), 1.0, atol=1e-5)
    assert jnp.allclose(out_padded[:, OUTPUT_SIZE:], 0.0)   # padded lanes carry 0 prob

    print("KERNEL_OK")
</pallas_src>

<mosaic_0001>
module attributes {stable_mosaic.version = 11 : i64} {
  func.func @snakenet_kernel(%arg0: memref<16x128xf32, #tpu.memory_space<vmem>>, %arg1: memref<3x128x128xf32, #tpu.memory_space<vmem>>, %arg2: memref<3x1x128xf32, #tpu.memory_space<vmem>>, %arg3: memref<16x128xf32, #tpu.memory_space<vmem>>) attributes {dimension_semantics = [], scalar_prefetch = 0 : i64, scratch_operands = 0 : i64, tpu.core_type = #tpu.core_type<tc>} {
    %c0 = arith.constant 0 : index
    %c0_0 = arith.constant 0 : index
    %0 = vector.load %arg0[%c0, %c0_0] : memref<16x128xf32, #tpu.memory_space<vmem>>, vector<16x128xf32>
    %c0_1 = arith.constant 0 : index
    %c0_2 = arith.constant 0 : index
    %c0_3 = arith.constant 0 : index
    %1 = vector.load %arg1[%c0_1, %c0_2, %c0_3] : memref<3x128x128xf32, #tpu.memory_space<vmem>>, vector<1x128x128xf32>
    %2 = vector.shape_cast %1 : vector<1x128x128xf32> to vector<128x128xf32>
    %cst = arith.constant dense<0.000000e+00> : vector<16x128xf32>
    %3 = tpu.matmul %0, %2, %cst {dimension_numbers = #tpu.dot_dimension_numbers<[1], [0], [0], [1], [0, 0, 1, 1], [], []>} : vector<16x128xf32>, vector<128x128xf32>, vector<16x128xf32> -> vector<16x128xf32>
    %c0_4 = arith.constant 0 : index
    %c0_5 = arith.constant 0 : index
    %c0_6 = arith.constant 0 : index
    %4 = vector.load %arg2[%c0_4, %c0_5, %c0_6] : memref<3x1x128xf32, #tpu.memory_space<vmem>>, vector<1x1x128xf32>
    %5 = vector.shape_cast %4 : vector<1x1x128xf32> to vector<1x128xf32>
    %6 = vector.broadcast %5 : vector<1x128xf32> to vector<16x128xf32>
    %7 = arith.addf %3, %6 : vector<16x128xf32>
    %cst_7 = arith.constant 0.000000e+00 : f32
    %8 = vector.broadcast %cst_7 : f32 to vector<16x128xf32>
    %9 = arith.maximumf %7, %8 : vector<16x128xf32>
    %c1 = arith.constant 1 : index
    %c0_8 = arith.constant 0 : index
    %c0_9 = arith.constant 0 : index
    %10 = vector.load %arg1[%c1, %c0_8, %c0_9] : memref<3x128x128xf32, #tpu.memory_space<vmem>>, vector<1x128x128xf32>
    %11 = vector.shape_cast %10 : vector<1x128x128xf32> to vector<128x128xf32>
    %cst_10 = arith.constant dense<0.000000e+00> : vector<16x128xf32>
    %12 = tpu.matmul %9, %11, %cst_10 {dimension_numbers = #tpu.dot_dimension_numbers<[1], [0], [0], [1], [0, 0, 1, 1], [], []>} : vector<16x128xf32>, vector<128x128xf32>, vector<16x128xf32> -> vector<16x128xf32>
    %c1_11 = arith.constant 1 : index
    %c0_12 = arith.constant 0 : index
    %c0_13 = arith.constant 0 : index
    %13 = vector.load %arg2[%c1_11, %c0_12, %c0_13] : memref<3x1x128xf32, #tpu.memory_space<vmem>>, vector<1x1x128xf32>
    %14 = vector.shape_cast %13 : vector<1x1x128xf32> to vector<1x128xf32>
    %15 = vector.broadcast %14 : vector<1x128xf32> to vector<16x128xf32>
    %16 = arith.addf %12, %15 : vector<16x128xf32>
    %cst_14 = arith.constant 0.000000e+00 : f32
    %17 = vector.broadcast %cst_14 : f32 to vector<16x128xf32>
    %18 = arith.maximumf %16, %17 : vector<16x128xf32>
    %c2 = arith.constant 2 : index
    %c0_15 = arith.constant 0 : index
    %c0_16 = arith.constant 0 : index
    %19 = vector.load %arg1[%c2, %c0_15, %c0_16] : memref<3x128x128xf32, #tpu.memory_space<vmem>>, vector<1x128x128xf32>
    %20 = vector.shape_cast %19 : vector<1x128x128xf32> to vector<128x128xf32>
    %cst_17 = arith.constant dense<0.000000e+00> : vector<16x128xf32>
    %21 = tpu.matmul %18, %20, %cst_17 {dimension_numbers = #tpu.dot_dimension_numbers<[1], [0], [0], [1], [0, 0, 1, 1], [], []>} : vector<16x128xf32>, vector<128x128xf32>, vector<16x128xf32> -> vector<16x128xf32>
    %c2_18 = arith.constant 2 : index
    %c0_19 = arith.constant 0 : index
    %c0_20 = arith.constant 0 : index
    %22 = vector.load %arg2[%c2_18, %c0_19, %c0_20] : memref<3x1x128xf32, #tpu.memory_space<vmem>>, vector<1x1x128xf32>
    %23 = vector.shape_cast %22 : vector<1x1x128xf32> to vector<1x128xf32>
    %24 = vector.broadcast %23 : vector<1x128xf32> to vector<16x128xf32>
    %25 = arith.addf %21, %24 : vector<16x128xf32>
    %cst_21 = arith.constant dense<0xFF800000> : vector<16xf32>
    %26 = vector.multi_reduction <maximumf>, %25, %cst_21 [1] : vector<16x128xf32> to vector<16xf32>
    %27 = vector.shape_cast %26 : vector<16xf32> to vector<16x1xf32>
    %28 = vector.broadcast %27 : vector<16x1xf32> to vector<16x128xf32>
    %29 = arith.subf %25, %28 : vector<16x128xf32>
    %30 = math.exp %29 : vector<16x128xf32>
    %cst_22 = arith.constant dense<0.000000e+00> : vector<16xf32>
    %31 = vector.multi_reduction <add>, %30, %cst_22 [1] : vector<16x128xf32> to vector<16xf32>
    %32 = vector.shape_cast %31 : vector<16xf32> to vector<16x1xf32>
    %33 = vector.broadcast %32 : vector<16x1xf32> to vector<16x128xf32>
    %34 = arith.divf %30, %33 : vector<16x128xf32>
    %c0_23 = arith.constant 0 : index
    %c0_24 = arith.constant 0 : index
    %35 = vector.load %arg3[%c0_23, %c0_24] : memref<16x128xf32, #tpu.memory_space<vmem>>, vector<16x128xf32>
    tpu.vector_store %arg3[%c0_23, %c0_24], %34 {strides = array<i32>} : memref<16x128xf32, #tpu.memory_space<vmem>>, vector<16x128xf32>,
    return
  }
}

</mosaic_0001>

<llo_original>
// kernel: tpu_custom_call.1
$region0: #{tpu_custom_call.1}
  #allocation0 [shape = 'u32[]', space=smem, size = 0x4, offset = 0x4, fixed_abs, tag = 'smem constant byte address 0x4 - core index']
  #allocation1 [shape = 'u32[144,128]{1,0:T(1,128)}', space=vmem, size = 0x12000, scoped, tag = 'internal scratch']
  %s0 = inlined_call_operand.hbm [shape: f32[16,128], index: 0, kind: input, shape index: {}]
  %s1 = inlined_call_operand.hbm [shape: f32[3,128,128], index: 1, kind: input, shape index: {}]
  %s2 = inlined_call_operand.vmem [shape: f32[3,1,128], index: 2, kind: input, shape index: {}]
  %s3 = inlined_call_operand.hbm [shape: f32[16,128], index: 3, kind: output, shape index: {}]
  %s4 = sld [smem:[#allocation0]]
  $region30: #{tpu_custom_call.1} parent=0
    _
  %s6 = ssub.s32 1, %s4
  %s7 = scalar_select 0, %s6, %s4
  $region1: #{tpu_custom_call.1} parent=0
    #allocation2 [shape = 'u8[8192]{0}', space=vmem, size = 0x2000, scoped, tag = 'input window, operand 0, single buffered']
    #allocation3 [shape = 's32[1]{0}', space=sflag, size = 0x4, scoped, tag = 'scoped memory for tpu_custom_call.1']
    #allocation4 [shape = 's32[1]{0}', space=sflag, size = 0x4, scoped, tag = 'scoped memory for tpu_custom_call.1']
    #allocation5 [shape = 'u8[196608]{0}', space=vmem, size = 0x30000, scoped, tag = 'input window, operand 1, single buffered']
    #allocation6 [shape = 's32[1]{0}', space=sflag, size = 0x4, scoped, tag = 'scoped memory for tpu_custom_call.1']
    #allocation7 [shape = 'u8[8192]{0}', space=vmem, size = 0x2000, scoped, tag = 'output window, operand 0, single buffered']
    %8 = vsyncpa [#allocation3], 0
    %9 = vsyncpa [#allocation6], 0
    %10 = vsyncpa [#allocation4], 0
    // Predicated region
    $region2: #{tpu_custom_call.1} parent=1 // pred_check
      _
    $region3: #{tpu_custom_call.1} parent=1 // pred_check_branch
      %12 = sbr.rel (0) target = $region5
    $region4: #{tpu_custom_call.1} parent=1 // pred_region
      %s14 = ssub.s32 256, 256
      %15 = vsyncadd [#allocation3], %s14
      %s16 = sshll.u32 [#allocation2], 4
      %s17 = int_to_ptr.vmem [resolvable:$true] %s16
      %22 = dma.hbm_to_vmem [thread:$0]  %s0, 256, %s17, [#allocation3], 128, 128, 8
    $region5: #{tpu_custom_call.1} parent=1 // pred_fallthru
      _
    // Predicated region
    $region6: #{tpu_custom_call.1} parent=1 // pred_check
      _
    $region7: #{tpu_custom_call.1} parent=1 // pred_check_branch
      %24 = sbr.rel (0) target = $region9
    $region8: #{tpu_custom_call.1} parent=1 // pred_region
      %s26 = ssub.s32 6144, 6144
      %27 = vsyncadd [#allocation6], %s26
      %s28 = sshll.u32 [#allocation5], 4
      %s29 = int_to_ptr.vmem [resolvable:$true] %s28
      %34 = dma.hbm_to_vmem [thread:$0]  %s1, 6144, %s29, [#allocation6], 128, 128, 8
    $region9: #{tpu_custom_call.1} parent=1 // pred_fallthru
      _
    // Predicated region
    $region10: #{tpu_custom_call.1} parent=1 // pred_check
      _
    $region11: #{tpu_custom_call.1} parent=1 // pred_check_branch
      %36 = sbr.rel (0) target = $region13
    $region12: #{tpu_custom_call.1} parent=1 // pred_region
      _
    $region13: #{tpu_custom_call.1} parent=1 // pred_fallthru
      _
    // Predicated region
    $region14: #{tpu_custom_call.1} parent=1 // pred_check
      _
    $region15: #{tpu_custom_call.1} parent=1 // pred_check_branch
      %38 = sbr.rel (0) target = $region17
    $region16: #{tpu_custom_call.1} parent=1 // pred_region
      %39 = dma.done [#allocation3], 256
    $region17: #{tpu_custom_call.1} parent=1 // pred_fallthru
      _
    // Predicated region
    $region18: #{tpu_custom_call.1} parent=1 // pred_check
      _
    $region19: #{tpu_custom_call.1} parent=1 // pred_check_branch
      %41 = sbr.rel (0) target = $region21
    $region20: #{tpu_custom_call.1} parent=1 // pred_region
      %42 = dma.done [#allocation6], 6144
    $region21: #{tpu_custom_call.1} parent=1 // pred_fallthru
      _
    %v43 = vld [vmem:[#allocation2] sm:$0xff]
    %v44 = vld [vmem:[#allocation2 + $0x8] sm:$0xff]
    %v45 = vld [vmem:[#allocation5] sm:$0xff]
    %v46 = vld [vmem:[#allocation5 + $0x8] sm:$0xff]
    %v47 = vld [vmem:[#allocation5 + $0x10] sm:$0xff]
    %v48 = vld [vmem:[#allocation5 + $0x18] sm:$0xff]
    %v49 = vld [vmem:[#allocation5 + $0x20] sm:$0xff]
    %v50 = vld [vmem:[#allocation5 + $0x28] sm:$0xff]
    %v51 = vld [vmem:[#allocation5 + $0x30] sm:$0xff]
    %v52 = vld [vmem:[#allocation5 + $0x38] sm:$0xff]
    %v53 = vld [vmem:[#allocation5 + $0x40] sm:$0xff]
    %v54 = vld [vmem:[#allocation5 + $0x48] sm:$0xff]
    %v55 = vld [vmem:[#allocation5 + $0x50] sm:$0xff]
    %v56 = vld [vmem:[#allocation5 + $0x58] sm:$0xff]
    %v57 = vld [vmem:[#allocation5 + $0x60] sm:$0xff]
    %v58 = vld [vmem:[#allocation5 + $0x68] sm:$0xff]
    %v59 = vld [vmem:[#allocation5 + $0x70] sm:$0xff]
    %v60 = vld [vmem:[#allocation5 + $0x78] sm:$0xff]
    %v61 = vld [vmem:[%s2] sm:$0x1]
    %v63 = vlaneseq
    %v64 = vshrl.u32 %v63, 7
    %v65 = vsub.s32 0, %v64
    %v66 = vrot.slane %v61, %v65
    %68 = vmatprep.subr.mxu0 0.0
    %69 = vmatpush1.msra.mxu0 %v45
    %70 = vmatprep.subr.mxu0 0.0
    %71 = vmatpush1.msra.mxu0 %v46
    %72 = vmatprep.subr.mxu0 0.0
    %73 = vmatpush1.msra.mxu0 %v47
    %74 = vmatprep.subr.mxu0 0.0
    %75 = vmatpush1.msra.mxu0 %v48
    %76 = vmatprep.subr.mxu0 0.0
    %77 = vmatpush1.msra.mxu0 %v49
    %78 = vmatprep.subr.mxu0 0.0
    %79 = vmatpush1.msra.mxu0 %v50
    %80 = vmatprep.subr.mxu0 0.0
    %81 = vmatpush1.msra.mxu0 %v51
    %82 = vmatprep.subr.mxu0 0.0
    %83 = vmatpush1.msra.mxu0 %v52
    %84 = vmatprep.subr.mxu0 0.0
    %85 = vmatpush1.msra.mxu0 %v53
    %86 = vmatprep.subr.mxu0 0.0
    %87 = vmatpush1.msra.mxu0 %v54
    %88 = vmatprep.subr.mxu0 0.0
    %89 = vmatpush1.msra.mxu0 %v55
    %90 = vmatprep.subr.mxu0 0.0
    %91 = vmatpush1.msra.mxu0 %v56
    %92 = vmatprep.subr.mxu0 0.0
    %93 = vmatpush1.msra.mxu0 %v57
    %94 = vmatprep.subr.mxu0 0.0
    %95 = vmatpush1.msra.mxu0 %v58
    %96 = vmatprep.subr.mxu0 0.0
    %97 = vmatpush1.msra.mxu0 %v59
    %98 = vmatprep.subr.mxu0 0.0
    %99 = vmatpush1.msra.mxu0 %v60
    %100 = vmatprep.subr.mxu0 0.0
    %101 = vmatpush1.msra.mxu0 0.0
    %102 = vmatprep.subr.mxu0 0.0
    %103 = vmatpush1.msra.mxu0 0.0
    %104 = vmatprep.subr.mxu0 0.0
    %105 = vmatpush1.msra.mxu0 0.0
    %106 = vmatprep.subr.mxu0 0.0
    %107 = vmatpush1.msra.mxu0 0.0
    %108 = vmatprep.subr.mxu0 0.0
    %109 = vmatpush1.msra.mxu0 0.0
    %110 = vmatprep.subr.mxu0 0.0
    %111 = vmatpush1.msra.mxu0 0.0
    %112 = vmatprep.subr.mxu0 0.0
    %113 = vmatpush1.msra.mxu0 0.0
    %114 = vmatprep.subr.mxu0 0.0
    %115 = vmatpush1.msra.mxu0 0.0
    %116 = vmatprep.subr.mxu0 0.0
    %117 = vmatpush1.msra.mxu0 0.0
    %118 = vmatprep.subr.mxu0 0.0
    %119 = vmatpush1.msra.mxu0 0.0
    %120 = vmatprep.subr.mxu0 0.0
    %121 = vmatpush1.msra.mxu0 0.0
    %122 = vmatprep.subr.mxu0 0.0
    %123 = vmatpush1.msra.mxu0 0.0
    %124 = vmatprep.subr.mxu0 0.0
    %125 = vmatpush1.msra.mxu0 0.0
    %126 = vmatprep.subr.mxu0 0.0
    %127 = vmatpush1.msra.mxu0 0.0
    %128 = vmatprep.subr.mxu0 0.0
    %129 = vmatpush1.msra.mxu0 0.0
    %130 = vmatprep.subr.mxu0 0.0
    %131 = vmatpush1.msra.mxu0 0.0
    %132 = vmatprep.mubr.f32.mxu0 0.0
    %133 = vmatmul.mubr.f32.gmra.mrb[0].mxu0 %v43
    %v134 = vpop.f32.mrb[0].mxu0
    %v135 = vadd.f32 %v66, %v134
    %v136 = vpop.f32.mrb[0].mxu0
    %137 = vmatprep.mubr.f32.mxu0 0.0
    %138 = vmatmul.mubr.f32.gmra.mrb[0].mxu0 %v44
    %v139 = vpop.f32.mrb[0].mxu0
    %v140 = vadd.f32 %v66, %v139
    %v141 = vpop.f32.mrb[0].mxu0
    %142 = vdwg.mxu0
    %v143 = vmax.f32 %v135, 0.0
    %v144 = vmax.f32 %v140, 0.0
    %s145 = scalar_lea.vmem [#allocation5], 128
    %v146 = vld [vmem:[%s145] sm:$0xff]
    %v147 = vld [vmem:[%s145 + $0x8] sm:$0xff]
    %v148 = vld [vmem:[%s145 + $0x10] sm:$0xff]
    %v149 = vld [vmem:[%s145 + $0x18] sm:$0xff]
    %v150 = vld [vmem:[%s145 + $0x20] sm:$0xff]
    %v151 = vld [vmem:[%s145 + $0x28] sm:$0xff]
    %v152 = vld [vmem:[%s145 + $0x30] sm:$0xff]
    %v153 = vld [vmem:[%s145 + $0x38] sm:$0xff]
    %v154 = vld [vmem:[%s145 + $0x40] sm:$0xff]
    %v155 = vld [vmem:[%s145 + $0x48] sm:$0xff]
    %v156 = vld [vmem:[%s145 + $0x50] sm:$0xff]
    %v157 = vld [vmem:[%s145 + $0x58] sm:$0xff]
    %v158 = vld [vmem:[%s145 + $0x60] sm:$0xff]
    %v159 = vld [vmem:[%s145 + $0x68] sm:$0xff]
    %v160 = vld [vmem:[%s145 + $0x70] sm:$0xff]
    %v161 = vld [vmem:[%s145 + $0x78] sm:$0xff]
    %s162 = scalar_lea.vmem %s2, 1
    %v163 = vld [vmem:[%s162] sm:$0x1]
    %v165 = vlaneseq
    %v166 = vshrl.u32 %v165, 7
    %v167 = vsub.s32 0, %v166
    %v168 = vrot.slane %v163, %v167
    %170 = vmatprep.subr.mxu0 0.0
    %171 = vmatpush1.msra.mxu0 %v146
    %172 = vmatprep.subr.mxu0 0.0
    %173 = vmatpush1.msra.mxu0 %v147
    %174 = vmatprep.subr.mxu0 0.0
    %175 = vmatpush1.msra.mxu0 %v148
    %176 = vmatprep.subr.mxu0 0.0
    %177 = vmatpush1.msra.mxu0 %v149
    %178 = vmatprep.subr.mxu0 0.0
    %179 = vmatpush1.msra.mxu0 %v150
    %180 = vmatprep.subr.mxu0 0.0
    %181 = vmatpush1.msra.mxu0 %v151
    %182 = vmatprep.subr.mxu0 0.0
    %183 = vmatpush1.msra.mxu0 %v152
    %184 = vmatprep.subr.mxu0 0.0
    %185 = vmatpush1.msra.mxu0 %v153
    %186 = vmatprep.subr.mxu0 0.0
    %187 = vmatpush1.msra.mxu0 %v154
    %188 = vmatprep.subr.mxu0 0.0
    %189 = vmatpush1.msra.mxu0 %v155
    %190 = vmatprep.subr.mxu0 0.0
    %191 = vmatpush1.msra.mxu0 %v156
    %192 = vmatprep.subr.mxu0 0.0
    %193 = vmatpush1.msra.mxu0 %v157
    %194 = vmatprep.subr.mxu0 0.0
    %195 = vmatpush1.msra.mxu0 %v158
    %196 = vmatprep.subr.mxu0 0.0
    %197 = vmatpush1.msra.mxu0 %v159
    %198 = vmatprep.subr.mxu0 0.0
    %199 = vmatpush1.msra.mxu0 %v160
    %200 = vmatprep.subr.mxu0 0.0
    %201 = vmatpush1.msra.mxu0 %v161
    %202 = vmatprep.subr.mxu0 0.0
    %203 = vmatpush1.msra.mxu0 0.0
    %204 = vmatprep.subr.mxu0 0.0
    %205 = vmatpush1.msra.mxu0 0.0
    %206 = vmatprep.subr.mxu0 0.0
    %207 = vmatpush1.msra.mxu0 0.0
    %208 = vmatprep.subr.mxu0 0.0
    %209 = vmatpush1.msra.mxu0 0.0
    %210 = vmatprep.subr.mxu0 0.0
    %211 = vmatpush1.msra.mxu0 0.0
    %212 = vmatprep.subr.mxu0 0.0
    %213 = vmatpush1.msra.mxu0 0.0
    %214 = vmatprep.subr.mxu0 0.0
    %215 = vmatpush1.msra.mxu0 0.0
    %216 = vmatprep.subr.mxu0 0.0
    %217 = vmatpush1.msra.mxu0 0.0
    %218 = vmatprep.subr.mxu0 0.0
    %219 = vmatpush1.msra.mxu0 0.0
    %220 = vmatprep.subr.mxu0 0.0
    %221 = vmatpush1.msra.mxu0 0.0
    %222 = vmatprep.subr.mxu0 0.0
    %223 = vmatpush1.msra.mxu0 0.0
    %224 = vmatprep.subr.mxu0 0.0
    %225 = vmatpush1.msra.mxu0 0.0
    %226 = vmatprep.subr.mxu0 0.0
    %227 = vmatpush1.msra.mxu0 0.0
    %228 = vmatprep.subr.mxu0 0.0
    %229 = vmatpush1.msra.mxu0 0.0
    %230 = vmatprep.subr.mxu0 0.0
    %231 = vmatpush1.msra.mxu0 0.0
    %232 = vmatprep.subr.mxu0 0.0
    %233 = vmatpush1.msra.mxu0 0.0
    %234 = vmatprep.mubr.f32.mxu0 0.0
    %235 = vmatmul.mubr.f32.gmra.mrb[0].mxu0 %v143
    %v236 = vpop.f32.mrb[0].mxu0
    %v237 = vadd.f32 %v168, %v236
    %v238 = vpop.f32.mrb[0].mxu0
    %239 = vmatprep.mubr.f32.mxu0 0.0
    %240 = vmatmul.mubr.f32.gmra.mrb[0].mxu0 %v144
    %v241 = vpop.f32.mrb[0].mxu0
    %v242 = vadd.f32 %v168, %v241
    %v243 = vpop.f32.mrb[0].mxu0
    %244 = vdwg.mxu0
    %v245 = vmax.f32 %v237, 0.0
    %v246 = vmax.f32 %v242, 0.0
    %s247 = scalar_lea.vmem [#allocation5], 256
    %v248 = vld [vmem:[%s247] sm:$0xff]
    %v249 = vld [vmem:[%s247 + $0x8] sm:$0xff]
    %v250 = vld [vmem:[%s247 + $0x10] sm:$0xff]
    %v251 = vld [vmem:[%s247 + $0x18] sm:$0xff]
    %v252 = vld [vmem:[%s247 + $0x20] sm:$0xff]
    %v253 = vld [vmem:[%s247 + $0x28] sm:$0xff]
    %v254 = vld [vmem:[%s247 + $0x30] sm:$0xff]
    %v255 = vld [vmem:[%s247 + $0x38] sm:$0xff]
    %v256 = vld [vmem:[%s247 + $0x40] sm:$0xff]
    %v257 = vld [vmem:[%s247 + $0x48] sm:$0xff]
    %v258 = vld [vmem:[%s247 + $0x50] sm:$0xff]
    %v259 = vld [vmem:[%s247 + $0x58] sm:$0xff]
    %v260 = vld [vmem:[%s247 + $0x60] sm:$0xff]
    %v261 = vld [vmem:[%s247 + $0x68] sm:$0xff]
    %v262 = vld [vmem:[%s247 + $0x70] sm:$0xff]
    %v263 = vld [vmem:[%s247 + $0x78] sm:$0xff]
    %s264 = scalar_lea.vmem %s2, 2
    %v265 = vld [vmem:[%s264] sm:$0x1]
    %v267 = vlaneseq
    %v268 = vshrl.u32 %v267, 7
    %v269 = vsub.s32 0, %v268
    %v270 = vrot.slane %v265, %v269
    %272 = vmatprep.subr.mxu0 0.0
    %273 = vmatpush1.msra.mxu0 %v248
    %274 = vmatprep.subr.mxu0 0.0
    %275 = vmatpush1.msra.mxu0 %v249
    %276 = vmatprep.subr.mxu0 0.0
    %277 = vmatpush1.msra.mxu0 %v250
    %278 = vmatprep.subr.mxu0 0.0
    %279 = vmatpush1.msra.mxu0 %v251
    %280 = vmatprep.subr.mxu0 0.0
    %281 = vmatpush1.msra.mxu0 %v252
    %282 = vmatprep.subr.mxu0 0.0
    %283 = vmatpush1.msra.mxu0 %v253
    %284 = vmatprep.subr.mxu0 0.0
    %285 = vmatpush1.msra.mxu0 %v254
    %286 = vmatprep.subr.mxu0 0.0
    %287 = vmatpush1.msra.mxu0 %v255
    %288 = vmatprep.subr.mxu0 0.0
    %289 = vmatpush1.msra.mxu0 %v256
    %290 = vmatprep.subr.mxu0 0.0
    %291 = vmatpush1.msra.mxu0 %v257
    %292 = vmatprep.subr.mxu0 0.0
    %293 = vmatpush1.msra.mxu0 %v258
    %294 = vmatprep.subr.mxu0 0.0
    %295 = vmatpush1.msra.mxu0 %v259
    %296 = vmatprep.subr.mxu0 0.0
    %297 = vmatpush1.msra.mxu0 %v260
    %298 = vmatprep.subr.mxu0 0.0
    %299 = vmatpush1.msra.mxu0 %v261
    %300 = vmatprep.subr.mxu0 0.0
    %301 = vmatpush1.msra.mxu0 %v262
    %302 = vmatprep.subr.mxu0 0.0
    %303 = vmatpush1.msra.mxu0 %v263
    %304 = vmatprep.subr.mxu0 0.0
    %305 = vmatpush1.msra.mxu0 0.0
    %306 = vmatprep.subr.mxu0 0.0
    %307 = vmatpush1.msra.mxu0 0.0
    %308 = vmatprep.subr.mxu0 0.0
    %309 = vmatpush1.msra.mxu0 0.0
    %310 = vmatprep.subr.mxu0 0.0
    %311 = vmatpush1.msra.mxu0 0.0
    %312 = vmatprep.subr.mxu0 0.0
    %313 = vmatpush1.msra.mxu0 0.0
    %314 = vmatprep.subr.mxu0 0.0
    %315 = vmatpush1.msra.mxu0 0.0
    %316 = vmatprep.subr.mxu0 0.0
    %317 = vmatpush1.msra.mxu0 0.0
    %318 = vmatprep.subr.mxu0 0.0
    %319 = vmatpush1.msra.mxu0 0.0
    %320 = vmatprep.subr.mxu0 0.0
    %321 = vmatpush1.msra.mxu0 0.0
    %322 = vmatprep.subr.mxu0 0.0
    %323 = vmatpush1.msra.mxu0 0.0
    %324 = vmatprep.subr.mxu0 0.0
    %325 = vmatpush1.msra.mxu0 0.0
    %326 = vmatprep.subr.mxu0 0.0
    %327 = vmatpush1.msra.mxu0 0.0
    %328 = vmatprep.subr.mxu0 0.0
    %329 = vmatpush1.msra.mxu0 0.0
    %330 = vmatprep.subr.mxu0 0.0
    %331 = vmatpush1.msra.mxu0 0.0
    %332 = vmatprep.subr.mxu0 0.0
    %333 = vmatpush1.msra.mxu0 0.0
    %334 = vmatprep.subr.mxu0 0.0
    %335 = vmatpush1.msra.mxu0 0.0
    %336 = vmatprep.mubr.f32.mxu0 0.0
    %337 = vmatmul.mubr.f32.gmra.mrb[0].mxu0 %v245
    %v338 = vpop.f32.mrb[0].mxu0
    %v339 = vadd.f32 %v270, %v338
    %v340 = vpop.f32.mrb[0].mxu0
    %341 = vmatprep.mubr.f32.mxu0 0.0
    %342 = vmatmul.mubr.f32.gmra.mrb[0].mxu0 %v246
    %v343 = vpop.f32.mrb[0].mxu0
    %v344 = vadd.f32 %v270, %v343
    %v345 = vpop.f32.mrb[0].mxu0
    %346 = vdwg.mxu0
    %347 = vmax.xlane.f32.xlu0 %v339
    %v348 = vpop.xlane.xlu0 %347
    %349 = vmax.xlane.f32.xlu0 %v344
    %v350 = vpop.xlane.xlu0 %349
    %v351 = vsub.f32 %v339, %v348
    %v352 = vsub.f32 %v344, %v350
    %v353 = vmul.f32 %v351, 1.442695
    %v354 = vpow.pop %v353
    %v355 = vmul.f32 %v352, 1.442695
    %v356 = vpow.pop %v355
    %357 = vadd.xlane.f32.xlu0 %v354
    %v358 = vpop.xlane.xlu0 %357
    %359 = vadd.xlane.f32.xlu0 %v356
    %v360 = vpop.xlane.xlu0 %359
    %v361 = vrcp.pop %v358
    %v362 = vmul.f32 %v354, %v361
    %v363 = vrcp.pop %v360
    %v364 = vmul.f32 %v356, %v363
    %365 = vst [vmem:[#allocation7] sm:$0xff] %v362
    %366 = vst [vmem:[#allocation7 + $0x8] sm:$0xff] %v364
    // Predicated region
    $region22: #{tpu_custom_call.1} parent=1 // pred_check
      _
    $region23: #{tpu_custom_call.1} parent=1 // pred_check_branch
      %368 = sbr.rel (0) target = $region25
    $region24: #{tpu_custom_call.1} parent=1 // pred_region
      %s370 = ssub.s32 256, 256
      %371 = vsyncadd [#allocation4], %s370
      %s372 = sshll.u32 [#allocation7], 4
      %s373 = int_to_ptr.vmem [resolvable:$true] %s372
      %378 = dma.vmem_to_hbm [thread:$0]  %s373, 256, %s3, [#allocation4], 128, 128, 8
    $region25: #{tpu_custom_call.1} parent=1 // pred_fallthru
      _
    // Predicated region
    $region26: #{tpu_custom_call.1} parent=1 // pred_check
      _
    $region27: #{tpu_custom_call.1} parent=1 // pred_check_branch
      %380 = sbr.rel (0) target = $region29
    $region28: #{tpu_custom_call.1} parent=1 // pred_region
      %381 = dma.done [#allocation4], 256
    $region29: #{tpu_custom_call.1} parent=1 // pred_fallthru
      _
    %382 = vsyncpa [#allocation3], 1
    %383 = vsyncpa [#allocation6], 1
    %384 = vsyncpa [#allocation4], 1

</llo_original>
